<compile_context>
chip_gen: v5e
topology: v5e:2x2
jax: 0.10.0
libtpu: 0.0.40
codegen_flags: <defaults>
</compile_context>

<pallas_src>
import jax
import jax.numpy as jnp
from jax.experimental import pallas as pl
from jax.experimental.pallas import tpu as pltpu


# ----------------------------------------------------------------------------
# Pallas kernel: per-branch channel matmuls accumulated in f32
# (== fused 1x1 conv over the channel-concat of the branches, never
#  materializing the concat in HBM).
# ----------------------------------------------------------------------------
def _make_mffu_kernel(num_branches):
    def kernel(*refs):
        xs = refs[:num_branches]                    # each (bn, cl_b, thw)
        ws = refs[num_branches:2 * num_branches]    # each (Cout, cl_b)
        b_ref = refs[2 * num_branches]              # (Cout, 1) f32
        o_ref = refs[2 * num_branches + 1]          # (bn, Cout, thw)

        w_vals = [w[...] for w in ws]               # tiny; hoisted out of loops
        bias = b_ref[...]
        bn = o_ref.shape[0]
        for n in range(bn):                         # static, small
            acc = jnp.dot(w_vals[0], xs[0][n],
                          preferred_element_type=jnp.float32)
            for i in range(1, num_branches):
                acc = acc + jnp.dot(w_vals[i], xs[i][n],
                                    preferred_element_type=jnp.float32)
            o_ref[n] = (acc + bias).astype(o_ref.dtype)

    return kernel


def fused_mffu_conv1x1(branches, wts, bias, *, compute_dtype=None,
                       vmem_block_budget=24 * 1024 * 1024,
                       vmem_limit_bytes=48 * 1024 * 1024):
    """y[n] = sum_b wt_b @ x_b[n] + bias  as one Pallas call (== 1x1 conv on
    the channel concat of the branches, without building the concat).

    branches : list of (N, cl_b, H, W) resized feature maps
    wts      : list of (Cout, cl_b) precombined per-branch weights
    bias     : (Cout,) combined bias
    returns  : (N, Cout, H, W)
    """
    num_branches = len(branches)
    N, _, H, W = branches[0].shape
    HW = H * W
    Cout = int(wts[0].shape[0])
    out_dtype = branches[0].dtype

    xs = [x.reshape(N, x.shape[1], HW) for x in branches]   # free reshape
    wts = [jnp.asarray(w) for w in wts]
    if compute_dtype is not None:
        # Cast the (small, per-branch) inputs so XLA fuses the cast into the
        # resize producers; f32 accumulation is kept inside the kernel.
        xs = [x.astype(compute_dtype) for x in xs]
        wts = [w.astype(compute_dtype) for w in wts]

    in_bytes = jnp.dtype(xs[0].dtype).itemsize
    out_bytes = jnp.dtype(out_dtype).itemsize

    # Zero-pad each branch's channel dim to a sublane multiple (8 for f32,
    # 16 for bf16).  No-op for aligned channel counts; fuses into producers.
    align = max(1, 32 // (in_bytes * 8) * 8) if in_bytes >= 4 else (16 if in_bytes == 2 else 32)
    align = {4: 8, 2: 16, 1: 32}.get(in_bytes, 8)
    xs_p, wts_p = [], []
    for x, w in zip(xs, wts):
        cl = int(x.shape[1])
        pad = (-cl) % align
        if pad:
            x = jnp.pad(x, ((0, 0), (0, pad), (0, 0)))
            w = jnp.pad(w, ((0, 0), (0, pad)))
        xs_p.append(x)
        wts_p.append(w)
    xs, wts = xs_p, wts_p
    Ctot = sum(int(x.shape[1]) for x in xs)

    bias2d = bias.astype(jnp.float32).reshape(Cout, 1)

    def per_lane_bytes(bn):
        # double-buffered inputs + double-buffered output + f32 accumulator
        return bn * (2 * Ctot * in_bytes + 2 * Cout * out_bytes + Cout * 4)

    def max_tile(bn):
        return (vmem_block_budget // per_lane_bytes(bn)) // 128 * 128

    t_fold = max_tile(N)
    if t_fold >= HW or t_fold >= 512:
        # Fold the whole batch into the block: fewer, fatter grid steps.
        bn = N
        thw = HW if t_fold >= HW else t_fold
        if thw == HW and HW >= 1024:
            # Megacore (v7x): emit >= 2 tiles when there's meaningful work.
            half = ((-(-HW // 2)) + 127) // 128 * 128
            if half < HW:
                thw = half
        n_hw = pl.cdiv(HW, thw)
        grid = (n_hw,)
        data_map = lambda t: (0, 0, t)
        const_map = lambda t: (0, 0)
    else:
        # Batch on the grid; flatten (N, hw_tiles) into ONE parallel axis so
        # both v7x TensorCores get work even when N == 1.
        bn = 1
        t1 = max_tile(1)
        thw = HW if (t1 >= HW or t1 < 128) else t1
        n_hw = pl.cdiv(HW, thw)
        grid = (N * n_hw,)
        data_map = lambda g: (g // n_hw, 0, g % n_hw)
        const_map = lambda g: (0, 0)

    in_specs = (
        [pl.BlockSpec((bn, int(x.shape[1]), thw), data_map) for x in xs]
        + [pl.BlockSpec((Cout, int(w.shape[1])), const_map) for w in wts]
        + [pl.BlockSpec((Cout, 1), const_map)]
    )
    out_spec = pl.BlockSpec((bn, Cout, thw), data_map)

    out = pl.pallas_call(
        _make_mffu_kernel(num_branches),
        out_shape=jax.ShapeDtypeStruct((N, Cout, HW), out_dtype),
        grid=grid,
        in_specs=in_specs,
        out_specs=out_spec,
        compiler_params=pltpu.CompilerParams(
            dimension_semantics=("parallel",),
            vmem_limit_bytes=vmem_limit_bytes),
    )(*xs, *wts, bias2d)

    return out.reshape(N, Cout, H, W)


# ----------------------------------------------------------------------------
# Resizing glue (per-channel linear resampling, plain JAX)
# ----------------------------------------------------------------------------
def _bilinear_upsample(x_nchw, target_hw):
    # matches F.interpolate(mode='bilinear', align_corners=False) for upsampling
    N, C, _, _ = x_nchw.shape
    return jax.image.resize(
        x_nchw, (N, C, target_hw[0], target_hw[1]), method="bilinear"
    ).astype(x_nchw.dtype)


def _adaptive_avg_pool2d(x_nchw, target_hw):
    N, C, H, W = x_nchw.shape
    OH, OW = target_hw
    if H % OH == 0 and W % OW == 0:
        fh, fw = H // OH, W // OW
        return jnp.mean(
            x_nchw.reshape(N, C, OH, fh, OW, fw), axis=(3, 5)
        ).astype(x_nchw.dtype)
    # general adaptive pooling (static small shapes -> unrolled at trace time)
    rows = []
    for oh in range(OH):
        hs, he = (oh * H) // OH, -(-((oh + 1) * H) // OH)
        cols = []
        for ow in range(OW):
            ws, we = (ow * W) // OW, -(-((ow + 1) * W) // OW)
            cols.append(jnp.mean(x_nchw[:, :, hs:he, ws:we], axis=(2, 3)))
        rows.append(jnp.stack(cols, axis=-1))
    return jnp.stack(rows, axis=-2).astype(x_nchw.dtype)


def _adjust_size(feature_map, original_hw, target_hw):
    # same lexicographic tuple comparison as the PyTorch module
    if tuple(original_hw) < tuple(target_hw):
        return _bilinear_upsample(feature_map, target_hw)
    elif tuple(original_hw) > tuple(target_hw):
        return _adaptive_avg_pool2d(feature_map, target_hw)
    else:
        return feature_map


# ----------------------------------------------------------------------------
# MFFU module in JAX + Pallas
# ----------------------------------------------------------------------------
class MFFUPallas:
    def __init__(self, scale, cl0, cl1, cl2, cl3, cl4, cl5, cl6,
                 out_channels, target_size, key, compute_dtype=None):
        if scale not in (2, 4):
            raise ValueError("scale must be 2 or 4")
        self.scale = scale
        self.target_size = tuple(target_size)
        self.out_channels = out_channels
        self.compute_dtype = compute_dtype
        cls = [cl0, cl1, cl2, cl3, cl4, cl5, cl6]
        keys = jax.random.split(key, 9)
        self.conv_w = []
        self.conv_b = []
        for i, cin in enumerate(cls):
            self.conv_w.append(
                0.1 * jax.random.normal(keys[i], (cin, out_channels), jnp.float32))
            self.conv_b.append(
                0.01 * jax.random.normal(jax.random.fold_in(keys[i], 1),
                                         (out_channels,), jnp.float32))
        self.fused_x2_w = 0.1 * jax.random.normal(
            keys[7], (out_channels * 6, out_channels), jnp.float32)
        self.fused_x2_b = 0.01 * jax.random.normal(
            jax.random.fold_in(keys[7], 1), (out_channels,), jnp.float32)
        self.fused_x4_w = 0.1 * jax.random.normal(
            keys[8], (out_channels * 7, out_channels), jnp.float32)
        self.fused_x4_b = 0.01 * jax.random.normal(
            jax.random.fold_in(keys[8], 1), (out_channels,), jnp.float32)

        self._precombine()

    # Fold (branch conv -> resize -> concat -> fused conv) into per-branch
    # weight slices of one channel matmul.  Resize commutes with the 1x1 conv
    # because it is per-channel linear with weights summing to 1.
    def _precombine(self):
        if self.scale == 2:
            self.branch_conv_idx = [0, 2, 3, 4, 5, 6]
            fw, fb = self.fused_x2_w, self.fused_x2_b
        else:  # scale == 4
            self.branch_conv_idx = [0, 1, 2, 3, 4, 5, 6]
            fw, fb = self.fused_x4_w, self.fused_x4_b
        Cout = self.out_channels
        self.wt_branches = []                                  # each (Cout, cl)
        b_comb = fb
        for slot, ci in enumerate(self.branch_conv_idx):
            fw_b = fw[slot * Cout:(slot + 1) * Cout, :]        # (Cout, Cout)
            self.wt_branches.append(jnp.transpose(self.conv_w[ci] @ fw_b))
            b_comb = b_comb + self.conv_b[ci] @ fw_b
        self.b_comb = b_comb                                   # (Cout,)

    def _raw_inputs(self, out, mid):
        if self.scale == 2:
            return [out[1], out[3], out[4], out[5], out[6], mid]
        return [out[1], out[2], out[3], out[4], out[5], out[6], mid]

    # Fast path: resize raw inputs, then ONE Pallas call over all branches.
    def forward(self, out, mid):
        raw = self._raw_inputs(out, mid)
        resized = [_adjust_size(x, x.shape[2:], self.target_size) for x in raw]
        return fused_mffu_conv1x1(resized, self.wt_branches, self.b_comb,
                                  compute_dtype=self.compute_dtype)

    # Pure-jnp reference following the original PyTorch op order.
    def forward_reference(self, out, mid):
        def conv(x, w, b):
            return jnp.einsum("nchw,cd->ndhw", x, w) + b[None, :, None, None]

        raw = self._raw_inputs(out, mid)
        feats = []
        for ci, x in zip(self.branch_conv_idx, raw):
            y = conv(x, self.conv_w[ci], self.conv_b[ci])
            feats.append(_adjust_size(y, x.shape[2:], self.target_size))
        fused = jnp.concatenate(feats, axis=1)
        if self.scale == 2:
            return conv(fused, self.fused_x2_w, self.fused_x2_b)
        return conv(fused, self.fused_x4_w, self.fused_x4_b)


if __name__ == "__main__":
    key = jax.random.PRNGKey(0)
    k_in, k_par = jax.random.split(key)

    # small shapes: N=2, out_channels=8, target spatial (16, 16), scale=4
    N = 2
    out_channels = 8
    target_size = (16, 16)
    cl = [4, 6, 8, 10, 12, 16, 16]  # cl0 .. cl6

    ks = jax.random.split(k_in, 8)
    out_list = [
        jax.random.normal(ks[0], (N, 4, 16, 16), jnp.float32),      # out[0] (unused)
        jax.random.normal(ks[1], (N, cl[0], 32, 32), jnp.float32),  # -> adaptive avg pool
        jax.random.normal(ks[2], (N, cl[1], 16, 16), jnp.float32),  # -> identity
        jax.random.normal(ks[3], (N, cl[2], 8, 8), jnp.float32),    # -> bilinear upsample
        jax.random.normal(ks[4], (N, cl[3], 16, 16), jnp.float32),  # -> identity
        jax.random.normal(ks[5], (N, cl[4], 8, 8), jnp.float32),    # -> bilinear upsample
        jax.random.normal(ks[6], (N, cl[5], 32, 32), jnp.float32),  # -> adaptive avg pool
    ]
    mid = jax.random.normal(ks[7], (N, cl[6], 16, 16), jnp.float32)

    module = MFFUPallas(4, *cl, out_channels, target_size, k_par)

    fwd = jax.jit(module.forward)
    result = jax.block_until_ready(fwd(out_list, mid))

    # reference: original op order (branch convs -> resize -> concat -> fused conv)
    ref = module.forward_reference(out_list, mid)
    assert result.shape == (N, out_channels, *target_size), result.shape
    max_err = float(jnp.max(jnp.abs(result - ref)))
    assert jnp.allclose(result, ref, atol=2e-4, rtol=2e-4), f"mismatch: {max_err}"

    print("KERNEL_OK")
</pallas_src>

<mosaic_0001>
module attributes {stable_mosaic.version = 11 : i64} {
  func.func @kernel(%arg0: i32, %arg1: memref<2x8x256xf32, #tpu.memory_space<vmem>>, %arg2: memref<2x8x256xf32, #tpu.memory_space<vmem>>, %arg3: memref<2x8x256xf32, #tpu.memory_space<vmem>>, %arg4: memref<2x16x256xf32, #tpu.memory_space<vmem>>, %arg5: memref<2x16x256xf32, #tpu.memory_space<vmem>>, %arg6: memref<2x16x256xf32, #tpu.memory_space<vmem>>, %arg7: memref<2x16x256xf32, #tpu.memory_space<vmem>>, %arg8: memref<8x8xf32, #tpu.memory_space<vmem>>, %arg9: memref<8x8xf32, #tpu.memory_space<vmem>>, %arg10: memref<8x8xf32, #tpu.memory_space<vmem>>, %arg11: memref<8x16xf32, #tpu.memory_space<vmem>>, %arg12: memref<8x16xf32, #tpu.memory_space<vmem>>, %arg13: memref<8x16xf32, #tpu.memory_space<vmem>>, %arg14: memref<8x16xf32, #tpu.memory_space<vmem>>, %arg15: memref<8x1xf32, #tpu.memory_space<vmem>>, %arg16: memref<2x8x256xf32, #tpu.memory_space<vmem>>) attributes {dimension_semantics = [#tpu.dimension_semantics<parallel>], iteration_bounds = array<i64: 1>, scalar_prefetch = 0 : i64, scratch_operands = 0 : i64, tpu.core_type = #tpu.core_type<tc>, window_params = [{transform_indices = @transform_0, window_bounds = array<i64: 2, 8, 256>}, {transform_indices = @transform_1, window_bounds = array<i64: 2, 8, 256>}, {transform_indices = @transform_2, window_bounds = array<i64: 2, 8, 256>}, {transform_indices = @transform_3, window_bounds = array<i64: 2, 16, 256>}, {transform_indices = @transform_4, window_bounds = array<i64: 2, 16, 256>}, {transform_indices = @transform_5, window_bounds = array<i64: 2, 16, 256>}, {transform_indices = @transform_6, window_bounds = array<i64: 2, 16, 256>}, {pipeline_mode = #tpu.pipeline_mode<synchronous>, transform_indices = @transform_7, window_bounds = array<i64: 8, 8>}, {pipeline_mode = #tpu.pipeline_mode<synchronous>, transform_indices = @transform_8, window_bounds = array<i64: 8, 8>}, {pipeline_mode = #tpu.pipeline_mode<synchronous>, transform_indices = @transform_9, window_bounds = array<i64: 8, 8>}, {pipeline_mode = #tpu.pipeline_mode<synchronous>, transform_indices = @transform_10, window_bounds = array<i64: 8, 16>}, {pipeline_mode = #tpu.pipeline_mode<synchronous>, transform_indices = @transform_11, window_bounds = array<i64: 8, 16>}, {pipeline_mode = #tpu.pipeline_mode<synchronous>, transform_indices = @transform_12, window_bounds = array<i64: 8, 16>}, {pipeline_mode = #tpu.pipeline_mode<synchronous>, transform_indices = @transform_13, window_bounds = array<i64: 8, 16>}, {pipeline_mode = #tpu.pipeline_mode<synchronous>, transform_indices = @transform_14, window_bounds = array<i64: 8, 1>}, {transform_indices = @transform_15, window_bounds = array<i64: 2, 8, 256>}]} {
    %c0 = arith.constant 0 : index
    %c0_0 = arith.constant 0 : index
    %0 = vector.load %arg8[%c0, %c0_0] : memref<8x8xf32, #tpu.memory_space<vmem>>, vector<8x8xf32>
    %c0_1 = arith.constant 0 : index
    %c0_2 = arith.constant 0 : index
    %1 = vector.load %arg9[%c0_1, %c0_2] : memref<8x8xf32, #tpu.memory_space<vmem>>, vector<8x8xf32>
    %c0_3 = arith.constant 0 : index
    %c0_4 = arith.constant 0 : index
    %2 = vector.load %arg10[%c0_3, %c0_4] : memref<8x8xf32, #tpu.memory_space<vmem>>, vector<8x8xf32>
    %c0_5 = arith.constant 0 : index
    %c0_6 = arith.constant 0 : index
    %3 = vector.load %arg11[%c0_5, %c0_6] : memref<8x16xf32, #tpu.memory_space<vmem>>, vector<8x16xf32>
    %c0_7 = arith.constant 0 : index
    %c0_8 = arith.constant 0 : index
    %4 = vector.load %arg12[%c0_7, %c0_8] : memref<8x16xf32, #tpu.memory_space<vmem>>, vector<8x16xf32>
    %c0_9 = arith.constant 0 : index
    %c0_10 = arith.constant 0 : index
    %5 = vector.load %arg13[%c0_9, %c0_10] : memref<8x16xf32, #tpu.memory_space<vmem>>, vector<8x16xf32>
    %c0_11 = arith.constant 0 : index
    %c0_12 = arith.constant 0 : index
    %6 = vector.load %arg14[%c0_11, %c0_12] : memref<8x16xf32, #tpu.memory_space<vmem>>, vector<8x16xf32>
    %c0_13 = arith.constant 0 : index
    %c0_14 = arith.constant 0 : index
    %7 = vector.load %arg15[%c0_13, %c0_14] : memref<8x1xf32, #tpu.memory_space<vmem>>, vector<8x1xf32>
    %c0_15 = arith.constant 0 : index
    %c0_16 = arith.constant 0 : index
    %c0_17 = arith.constant 0 : index
    %8 = vector.load %arg1[%c0_15, %c0_16, %c0_17] : memref<2x8x256xf32, #tpu.memory_space<vmem>>, vector<1x8x256xf32>
    %9 = vector.shape_cast %8 : vector<1x8x256xf32> to vector<8x256xf32>
    %cst = arith.constant dense<0.000000e+00> : vector<8x256xf32>
    %10 = tpu.matmul %0, %9, %cst {dimension_numbers = #tpu.dot_dimension_numbers<[1], [0], [0], [1], [0, 0, 1, 1], [], []>} : vector<8x8xf32>, vector<8x256xf32>, vector<8x256xf32> -> vector<8x256xf32>
    %c0_18 = arith.constant 0 : index
    %c0_19 = arith.constant 0 : index
    %c0_20 = arith.constant 0 : index
    %11 = vector.load %arg2[%c0_18, %c0_19, %c0_20] : memref<2x8x256xf32, #tpu.memory_space<vmem>>, vector<1x8x256xf32>
    %12 = vector.shape_cast %11 : vector<1x8x256xf32> to vector<8x256xf32>
    %cst_21 = arith.constant dense<0.000000e+00> : vector<8x256xf32>
    %13 = tpu.matmul %1, %12, %cst_21 {dimension_numbers = #tpu.dot_dimension_numbers<[1], [0], [0], [1], [0, 0, 1, 1], [], []>} : vector<8x8xf32>, vector<8x256xf32>, vector<8x256xf32> -> vector<8x256xf32>
    %14 = arith.addf %10, %13 : vector<8x256xf32>
    %c0_22 = arith.constant 0 : index
    %c0_23 = arith.constant 0 : index
    %c0_24 = arith.constant 0 : index
    %15 = vector.load %arg3[%c0_22, %c0_23, %c0_24] : memref<2x8x256xf32, #tpu.memory_space<vmem>>, vector<1x8x256xf32>
    %16 = vector.shape_cast %15 : vector<1x8x256xf32> to vector<8x256xf32>
    %cst_25 = arith.constant dense<0.000000e+00> : vector<8x256xf32>
    %17 = tpu.matmul %2, %16, %cst_25 {dimension_numbers = #tpu.dot_dimension_numbers<[1], [0], [0], [1], [0, 0, 1, 1], [], []>} : vector<8x8xf32>, vector<8x256xf32>, vector<8x256xf32> -> vector<8x256xf32>
    %18 = arith.addf %14, %17 : vector<8x256xf32>
    %c0_26 = arith.constant 0 : index
    %c0_27 = arith.constant 0 : index
    %c0_28 = arith.constant 0 : index
    %19 = vector.load %arg4[%c0_26, %c0_27, %c0_28] : memref<2x16x256xf32, #tpu.memory_space<vmem>>, vector<1x16x256xf32>
    %20 = vector.shape_cast %19 : vector<1x16x256xf32> to vector<16x256xf32>
    %cst_29 = arith.constant dense<0.000000e+00> : vector<8x256xf32>
    %21 = tpu.matmul %3, %20, %cst_29 {dimension_numbers = #tpu.dot_dimension_numbers<[1], [0], [0], [1], [0, 0, 1, 1], [], []>} : vector<8x16xf32>, vector<16x256xf32>, vector<8x256xf32> -> vector<8x256xf32>
    %22 = arith.addf %18, %21 : vector<8x256xf32>
    %c0_30 = arith.constant 0 : index
    %c0_31 = arith.constant 0 : index
    %c0_32 = arith.constant 0 : index
    %23 = vector.load %arg5[%c0_30, %c0_31, %c0_32] : memref<2x16x256xf32, #tpu.memory_space<vmem>>, vector<1x16x256xf32>
    %24 = vector.shape_cast %23 : vector<1x16x256xf32> to vector<16x256xf32>
    %cst_33 = arith.constant dense<0.000000e+00> : vector<8x256xf32>
    %25 = tpu.matmul %4, %24, %cst_33 {dimension_numbers = #tpu.dot_dimension_numbers<[1], [0], [0], [1], [0, 0, 1, 1], [], []>} : vector<8x16xf32>, vector<16x256xf32>, vector<8x256xf32> -> vector<8x256xf32>
    %26 = arith.addf %22, %25 : vector<8x256xf32>
    %c0_34 = arith.constant 0 : index
    %c0_35 = arith.constant 0 : index
    %c0_36 = arith.constant 0 : index
    %27 = vector.load %arg6[%c0_34, %c0_35, %c0_36] : memref<2x16x256xf32, #tpu.memory_space<vmem>>, vector<1x16x256xf32>
    %28 = vector.shape_cast %27 : vector<1x16x256xf32> to vector<16x256xf32>
    %cst_37 = arith.constant dense<0.000000e+00> : vector<8x256xf32>
    %29 = tpu.matmul %5, %28, %cst_37 {dimension_numbers = #tpu.dot_dimension_numbers<[1], [0], [0], [1], [0, 0, 1, 1], [], []>} : vector<8x16xf32>, vector<16x256xf32>, vector<8x256xf32> -> vector<8x256xf32>
    %30 = arith.addf %26, %29 : vector<8x256xf32>
    %c0_38 = arith.constant 0 : index
    %c0_39 = arith.constant 0 : index
    %c0_40 = arith.constant 0 : index
    %31 = vector.load %arg7[%c0_38, %c0_39, %c0_40] : memref<2x16x256xf32, #tpu.memory_space<vmem>>, vector<1x16x256xf32>
    %32 = vector.shape_cast %31 : vector<1x16x256xf32> to vector<16x256xf32>
    %cst_41 = arith.constant dense<0.000000e+00> : vector<8x256xf32>
    %33 = tpu.matmul %6, %32, %cst_41 {dimension_numbers = #tpu.dot_dimension_numbers<[1], [0], [0], [1], [0, 0, 1, 1], [], []>} : vector<8x16xf32>, vector<16x256xf32>, vector<8x256xf32> -> vector<8x256xf32>
    %34 = arith.addf %30, %33 : vector<8x256xf32>
    %35 = vector.broadcast %7 : vector<8x1xf32> to vector<8x256xf32>
    %36 = arith.addf %34, %35 : vector<8x256xf32>
    %c0_42 = arith.constant 0 : index
    %c0_43 = arith.constant 0 : index
    %c0_44 = arith.constant 0 : index
    %37 = vector.load %arg16[%c0_42, %c0_43, %c0_44] : memref<2x8x256xf32, #tpu.memory_space<vmem>>, vector<1x8x256xf32>
    %38 = vector.shape_cast %37 : vector<1x8x256xf32> to vector<8x256xf32>
    %39 = vector.shape_cast %36 : vector<8x256xf32> to vector<1x8x256xf32>
    tpu.vector_store %arg16[%c0_42, %c0_43, %c0_44], %39 {strides = array<i32>} : memref<2x8x256xf32, #tpu.memory_space<vmem>>, vector<1x8x256xf32>,
    %c1 = arith.constant 1 : index
    %c0_45 = arith.constant 0 : index
    %c0_46 = arith.constant 0 : index
    %40 = vector.load %arg1[%c1, %c0_45, %c0_46] : memref<2x8x256xf32, #tpu.memory_space<vmem>>, vector<1x8x256xf32>
    %41 = vector.shape_cast %40 : vector<1x8x256xf32> to vector<8x256xf32>
    %cst_47 = arith.constant dense<0.000000e+00> : vector<8x256xf32>
    %42 = tpu.matmul %0, %41, %cst_47 {dimension_numbers = #tpu.dot_dimension_numbers<[1], [0], [0], [1], [0, 0, 1, 1], [], []>} : vector<8x8xf32>, vector<8x256xf32>, vector<8x256xf32> -> vector<8x256xf32>
    %c1_48 = arith.constant 1 : index
    %c0_49 = arith.constant 0 : index
    %c0_50 = arith.constant 0 : index
    %43 = vector.load %arg2[%c1_48, %c0_49, %c0_50] : memref<2x8x256xf32, #tpu.memory_space<vmem>>, vector<1x8x256xf32>
    %44 = vector.shape_cast %43 : vector<1x8x256xf32> to vector<8x256xf32>
    %cst_51 = arith.constant dense<0.000000e+00> : vector<8x256xf32>
    %45 = tpu.matmul %1, %44, %cst_51 {dimension_numbers = #tpu.dot_dimension_numbers<[1], [0], [0], [1], [0, 0, 1, 1], [], []>} : vector<8x8xf32>, vector<8x256xf32>, vector<8x256xf32> -> vector<8x256xf32>
    %46 = arith.addf %42, %45 : vector<8x256xf32>
    %c1_52 = arith.constant 1 : index
    %c0_53 = arith.constant 0 : index
    %c0_54 = arith.constant 0 : index
    %47 = vector.load %arg3[%c1_52, %c0_53, %c0_54] : memref<2x8x256xf32, #tpu.memory_space<vmem>>, vector<1x8x256xf32>
    %48 = vector.shape_cast %47 : vector<1x8x256xf32> to vector<8x256xf32>
    %cst_55 = arith.constant dense<0.000000e+00> : vector<8x256xf32>
    %49 = tpu.matmul %2, %48, %cst_55 {dimension_numbers = #tpu.dot_dimension_numbers<[1], [0], [0], [1], [0, 0, 1, 1], [], []>} : vector<8x8xf32>, vector<8x256xf32>, vector<8x256xf32> -> vector<8x256xf32>
    %50 = arith.addf %46, %49 : vector<8x256xf32>
    %c1_56 = arith.constant 1 : index
    %c0_57 = arith.constant 0 : index
    %c0_58 = arith.constant 0 : index
    %51 = vector.load %arg4[%c1_56, %c0_57, %c0_58] : memref<2x16x256xf32, #tpu.memory_space<vmem>>, vector<1x16x256xf32>
    %52 = vector.shape_cast %51 : vector<1x16x256xf32> to vector<16x256xf32>
    %cst_59 = arith.constant dense<0.000000e+00> : vector<8x256xf32>
    %53 = tpu.matmul %3, %52, %cst_59 {dimension_numbers = #tpu.dot_dimension_numbers<[1], [0], [0], [1], [0, 0, 1, 1], [], []>} : vector<8x16xf32>, vector<16x256xf32>, vector<8x256xf32> -> vector<8x256xf32>
    %54 = arith.addf %50, %53 : vector<8x256xf32>
    %c1_60 = arith.constant 1 : index
    %c0_61 = arith.constant 0 : index
    %c0_62 = arith.constant 0 : index
    %55 = vector.load %arg5[%c1_60, %c0_61, %c0_62] : memref<2x16x256xf32, #tpu.memory_space<vmem>>, vector<1x16x256xf32>
    %56 = vector.shape_cast %55 : vector<1x16x256xf32> to vector<16x256xf32>
    %cst_63 = arith.constant dense<0.000000e+00> : vector<8x256xf32>
    %57 = tpu.matmul %4, %56, %cst_63 {dimension_numbers = #tpu.dot_dimension_numbers<[1], [0], [0], [1], [0, 0, 1, 1], [], []>} : vector<8x16xf32>, vector<16x256xf32>, vector<8x256xf32> -> vector<8x256xf32>
    %58 = arith.addf %54, %57 : vector<8x256xf32>
    %c1_64 = arith.constant 1 : index
    %c0_65 = arith.constant 0 : index
    %c0_66 = arith.constant 0 : index
    %59 = vector.load %arg6[%c1_64, %c0_65, %c0_66] : memref<2x16x256xf32, #tpu.memory_space<vmem>>, vector<1x16x256xf32>
    %60 = vector.shape_cast %59 : vector<1x16x256xf32> to vector<16x256xf32>
    %cst_67 = arith.constant dense<0.000000e+00> : vector<8x256xf32>
    %61 = tpu.matmul %5, %60, %cst_67 {dimension_numbers = #tpu.dot_dimension_numbers<[1], [0], [0], [1], [0, 0, 1, 1], [], []>} : vector<8x16xf32>, vector<16x256xf32>, vector<8x256xf32> -> vector<8x256xf32>
    %62 = arith.addf %58, %61 : vector<8x256xf32>
    %c1_68 = arith.constant 1 : index
    %c0_69 = arith.constant 0 : index
    %c0_70 = arith.constant 0 : index
    %63 = vector.load %arg7[%c1_68, %c0_69, %c0_70] : memref<2x16x256xf32, #tpu.memory_space<vmem>>, vector<1x16x256xf32>
    %64 = vector.shape_cast %63 : vector<1x16x256xf32> to vector<16x256xf32>
    %cst_71 = arith.constant dense<0.000000e+00> : vector<8x256xf32>
    %65 = tpu.matmul %6, %64, %cst_71 {dimension_numbers = #tpu.dot_dimension_numbers<[1], [0], [0], [1], [0, 0, 1, 1], [], []>} : vector<8x16xf32>, vector<16x256xf32>, vector<8x256xf32> -> vector<8x256xf32>
    %66 = arith.addf %62, %65 : vector<8x256xf32>
    %67 = vector.broadcast %7 : vector<8x1xf32> to vector<8x256xf32>
    %68 = arith.addf %66, %67 : vector<8x256xf32>
    %c1_72 = arith.constant 1 : index
    %c0_73 = arith.constant 0 : index
    %c0_74 = arith.constant 0 : index
    %69 = vector.load %arg16[%c1_72, %c0_73, %c0_74] : memref<2x8x256xf32, #tpu.memory_space<vmem>>, vector<1x8x256xf32>
    %70 = vector.shape_cast %69 : vector<1x8x256xf32> to vector<8x256xf32>
    %71 = vector.shape_cast %68 : vector<8x256xf32> to vector<1x8x256xf32>
    tpu.vector_store %arg16[%c1_72, %c0_73, %c0_74], %71 {strides = array<i32>} : memref<2x8x256xf32, #tpu.memory_space<vmem>>, vector<1x8x256xf32>,
    return
  }
  func.func @transform_0(%arg0: i32) -> (i32, i32, i32) {
    %c0_i32 = arith.constant 0 : i32
    %c0_i32_0 = arith.constant 0 : i32
    %c0_i32_1 = arith.constant 0 : i32
    return %c0_i32, %c0_i32_0, %arg0 : i32, i32, i32
  }
  func.func @transform_1(%arg0: i32) -> (i32, i32, i32) {
    %c0_i32 = arith.constant 0 : i32
    %c0_i32_0 = arith.constant 0 : i32
    %c0_i32_1 = arith.constant 0 : i32
    return %c0_i32, %c0_i32_0, %arg0 : i32, i32, i32
  }
  func.func @transform_2(%arg0: i32) -> (i32, i32, i32) {
    %c0_i32 = arith.constant 0 : i32
    %c0_i32_0 = arith.constant 0 : i32
    %c0_i32_1 = arith.constant 0 : i32
    return %c0_i32, %c0_i32_0, %arg0 : i32, i32, i32
  }
  func.func @transform_3(%arg0: i32) -> (i32, i32, i32) {
    %c0_i32 = arith.constant 0 : i32
    %c0_i32_0 = arith.constant 0 : i32
    %c0_i32_1 = arith.constant 0 : i32
    return %c0_i32, %c0_i32_0, %arg0 : i32, i32, i32
  }
  func.func @transform_4(%arg0: i32) -> (i32, i32, i32) {
    %c0_i32 = arith.constant 0 : i32
    %c0_i32_0 = arith.constant 0 : i32
    %c0_i32_1 = arith.constant 0 : i32
    return %c0_i32, %c0_i32_0, %arg0 : i32, i32, i32
  }
  func.func @transform_5(%arg0: i32) -> (i32, i32, i32) {
    %c0_i32 = arith.constant 0 : i32
    %c0_i32_0 = arith.constant 0 : i32
    %c0_i32_1 = arith.constant 0 : i32
    return %c0_i32, %c0_i32_0, %arg0 : i32, i32, i32
  }
  func.func @transform_6(%arg0: i32) -> (i32, i32, i32) {
    %c0_i32 = arith.constant 0 : i32
    %c0_i32_0 = arith.constant 0 : i32
    %c0_i32_1 = arith.constant 0 : i32
    return %c0_i32, %c0_i32_0, %arg0 : i32, i32, i32
  }
  func.func @transform_7(%arg0: i32) -> (i32, i32) {
    %c0_i32 = arith.constant 0 : i32
    %c0_i32_0 = arith.constant 0 : i32
    %c0_i32_1 = arith.constant 0 : i32
    return %c0_i32, %c0_i32_0 : i32, i32
  }
  func.func @transform_8(%arg0: i32) -> (i32, i32) {
    %c0_i32 = arith.constant 0 : i32
    %c0_i32_0 = arith.constant 0 : i32
    %c0_i32_1 = arith.constant 0 : i32
    return %c0_i32, %c0_i32_0 : i32, i32
  }
  func.func @transform_9(%arg0: i32) -> (i32, i32) {
    %c0_i32 = arith.constant 0 : i32
    %c0_i32_0 = arith.constant 0 : i32
    %c0_i32_1 = arith.constant 0 : i32
    return %c0_i32, %c0_i32_0 : i32, i32
  }
  func.func @transform_10(%arg0: i32) -> (i32, i32) {
    %c0_i32 = arith.constant 0 : i32
    %c0_i32_0 = arith.constant 0 : i32
    %c0_i32_1 = arith.constant 0 : i32
    return %c0_i32, %c0_i32_0 : i32, i32
  }
  func.func @transform_11(%arg0: i32) -> (i32, i32) {
    %c0_i32 = arith.constant 0 : i32
    %c0_i32_0 = arith.constant 0 : i32
    %c0_i32_1 = arith.constant 0 : i32
    return %c0_i32, %c0_i32_0 : i32, i32
  }
  func.func @transform_12(%arg0: i32) -> (i32, i32) {
    %c0_i32 = arith.constant 0 : i32
    %c0_i32_0 = arith.constant 0 : i32
    %c0_i32_1 = arith.constant 0 : i32
    return %c0_i32, %c0_i32_0 : i32, i32
  }
  func.func @transform_13(%arg0: i32) -> (i32, i32) {
    %c0_i32 = arith.constant 0 : i32
    %c0_i32_0 = arith.constant 0 : i32
    %c0_i32_1 = arith.constant 0 : i32
    return %c0_i32, %c0_i32_0 : i32, i32
  }
  func.func @transform_14(%arg0: i32) -> (i32, i32) {
    %c0_i32 = arith.constant 0 : i32
    %c0_i32_0 = arith.constant 0 : i32
    %c0_i32_1 = arith.constant 0 : i32
    return %c0_i32, %c0_i32_0 : i32, i32
  }
  func.func @transform_15(%arg0: i32) -> (i32, i32, i32) {
    %c0_i32 = arith.constant 0 : i32
    %c0_i32_0 = arith.constant 0 : i32
    %c0_i32_1 = arith.constant 0 : i32
    return %c0_i32, %c0_i32_0, %arg0 : i32, i32, i32
  }
}

</mosaic_0001>

<llo_original>
// kernel: forward.1
$region0: #{forward.1}
  #allocation0 [shape = 'u32[]', space=smem, size = 0x4, offset = 0x4, fixed_abs, tag = 'smem constant byte address 0x4 - core index']
  #allocation1 [shape = 'u32[72,128]{1,0:T(1,128)}', space=vmem, size = 0x9000, scoped, tag = 'internal scratch']
  %s0 = inlined_call_operand.vmem [shape: f32[2,8,256], index: 0, kind: input, shape index: {}]
  %s1 = inlined_call_operand.vmem [shape: f32[2,8,256], index: 1, kind: input, shape index: {}]
  %s2 = inlined_call_operand.vmem [shape: f32[2,8,256], index: 2, kind: input, shape index: {}]
  %s3 = inlined_call_operand.vmem [shape: f32[2,16,256], index: 3, kind: input, shape index: {}]
  %s4 = inlined_call_operand.vmem [shape: f32[2,16,256], index: 4, kind: input, shape index: {}]
  %s5 = inlined_call_operand.vmem [shape: f32[2,16,256], index: 5, kind: input, shape index: {}]
  %s6 = inlined_call_operand.vmem [shape: f32[2,16,256], index: 6, kind: input, shape index: {}]
  %s7 = inlined_call_operand.vmem [shape: f32[8,8], index: 7, kind: input, shape index: {}]
  %s8 = inlined_call_operand.vmem [shape: f32[8,8], index: 8, kind: input, shape index: {}]
  %s9 = inlined_call_operand.vmem [shape: f32[8,8], index: 9, kind: input, shape index: {}]
  %s10 = inlined_call_operand.vmem [shape: f32[8,16], index: 10, kind: input, shape index: {}]
  %s11 = inlined_call_operand.vmem [shape: f32[8,16], index: 11, kind: input, shape index: {}]
  %s12 = inlined_call_operand.vmem [shape: f32[8,16], index: 12, kind: input, shape index: {}]
  %s13 = inlined_call_operand.vmem [shape: f32[8,16], index: 13, kind: input, shape index: {}]
  %s14 = inlined_call_operand.vmem [shape: f32[8,1], index: 14, kind: input, shape index: {}]
  %s15 = inlined_call_operand.vmem [shape: f32[2,8,256], index: 15, kind: output, shape index: {}]
  %s16 = sld [smem:[#allocation0]]
  $region70: #{forward.1} parent=0
    _
  %s18 = ssub.s32 1, %s16
  %s19 = scalar_select 0, %s18, %s16
  // Predicated region
  $region2: #{forward.1} parent=0 // pred_check
    _
  $region3: #{forward.1} parent=0 // pred_check_branch
    %21 = sbr.rel (0) target = $region5
  $region4: #{forward.1} parent=0 // pred_region
    _
  $region5: #{forward.1} parent=0 // pred_fallthru
    _
  // Predicated region
  $region6: #{forward.1} parent=0 // pred_check
    _
  $region7: #{forward.1} parent=0 // pred_check_branch
    %23 = sbr.rel (0) target = $region9
  $region8: #{forward.1} parent=0 // pred_region
    _
  $region9: #{forward.1} parent=0 // pred_fallthru
    _
  // Predicated region
  $region10: #{forward.1} parent=0 // pred_check
    _
  $region11: #{forward.1} parent=0 // pred_check_branch
    %25 = sbr.rel (0) target = $region13
  $region12: #{forward.1} parent=0 // pred_region
    _
  $region13: #{forward.1} parent=0 // pred_fallthru
    _
  // Predicated region
  $region14: #{forward.1} parent=0 // pred_check
    _
  $region15: #{forward.1} parent=0 // pred_check_branch
    %27 = sbr.rel (0) target = $region17
  $region16: #{forward.1} parent=0 // pred_region
    _
  $region17: #{forward.1} parent=0 // pred_fallthru
    _
  // Predicated region
  $region18: #{forward.1} parent=0 // pred_check
    _
  $region19: #{forward.1} parent=0 // pred_check_branch
    %29 = sbr.rel (0) target = $region21
  $region20: #{forward.1} parent=0 // pred_region
    _
  $region21: #{forward.1} parent=0 // pred_fallthru
    _
  // Predicated region
  $region22: #{forward.1} parent=0 // pred_check
    _
  $region23: #{forward.1} parent=0 // pred_check_branch
    %31 = sbr.rel (0) target = $region25
  $region24: #{forward.1} parent=0 // pred_region
    _
  $region25: #{forward.1} parent=0 // pred_fallthru
    _
  // Predicated region
  $region26: #{forward.1} parent=0 // pred_check
    _
  $region27: #{forward.1} parent=0 // pred_check_branch
    %33 = sbr.rel (0) target = $region29
  $region28: #{forward.1} parent=0 // pred_region
    _
  $region29: #{forward.1} parent=0 // pred_fallthru
    _
  // Predicated region
  $region30: #{forward.1} parent=0 // pred_check
    _
  $region31: #{forward.1} parent=0 // pred_check_branch
    %35 = sbr.rel (0) target = $region33
  $region32: #{forward.1} parent=0 // pred_region
    _
  $region33: #{forward.1} parent=0 // pred_fallthru
    _
  // Predicated region
  $region34: #{forward.1} parent=0 // pred_check
    _
  $region35: #{forward.1} parent=0 // pred_check_branch
    %37 = sbr.rel (0) target = $region37
  $region36: #{forward.1} parent=0 // pred_region
    _
  $region37: #{forward.1} parent=0 // pred_fallthru
    _
  // Predicated region
  $region38: #{forward.1} parent=0 // pred_check
    _
  $region39: #{forward.1} parent=0 // pred_check_branch
    %39 = sbr.rel (0) target = $region41
  $region40: #{forward.1} parent=0 // pred_region
    _
  $region41: #{forward.1} parent=0 // pred_fallthru
    _
  // Predicated region
  $region42: #{forward.1} parent=0 // pred_check
    _
  $region43: #{forward.1} parent=0 // pred_check_branch
    %41 = sbr.rel (0) target = $region45
  $region44: #{forward.1} parent=0 // pred_region
    _
  $region45: #{forward.1} parent=0 // pred_fallthru
    _
  // Predicated region
  $region46: #{forward.1} parent=0 // pred_check
    _
  $region47: #{forward.1} parent=0 // pred_check_branch
    %43 = sbr.rel (0) target = $region49
  $region48: #{forward.1} parent=0 // pred_region
    _
  $region49: #{forward.1} parent=0 // pred_fallthru
    _
  // Predicated region
  $region50: #{forward.1} parent=0 // pred_check
    _
  $region51: #{forward.1} parent=0 // pred_check_branch
    %45 = sbr.rel (0) target = $region53
  $region52: #{forward.1} parent=0 // pred_region
    _
  $region53: #{forward.1} parent=0 // pred_fallthru
    _
  // Predicated region
  $region54: #{forward.1} parent=0 // pred_check
    _
  $region55: #{forward.1} parent=0 // pred_check_branch
    %47 = sbr.rel (0) target = $region57
  $region56: #{forward.1} parent=0 // pred_region
    _
  $region57: #{forward.1} parent=0 // pred_fallthru
    _
  // Predicated region
  $region58: #{forward.1} parent=0 // pred_check
    _
  $region59: #{forward.1} parent=0 // pred_check_branch
    %49 = sbr.rel (0) target = $region61
  $region60: #{forward.1} parent=0 // pred_region
    _
  $region61: #{forward.1} parent=0 // pred_fallthru
    _
  %v50 = vld [vmem:[%s7] sm:$0xff]
  %v51 = vld [vmem:[%s8] sm:$0xff]
  %v52 = vld [vmem:[%s9] sm:$0xff]
  %v53 = vld [vmem:[%s10] sm:$0xff]
  %v54 = vld [vmem:[%s11] sm:$0xff]
  %v55 = vld [vmem:[%s12] sm:$0xff]
  %v56 = vld [vmem:[%s13] sm:$0xff]
  %v57 = vld [vmem:[%s14] sm:$0xff]
  %v58 = vld [vmem:[%s0] sm:$0xff]
  %v59 = vld [vmem:[%s0 + $0x8] sm:$0xff]
  %v60 = vld [vmem:[%s1] sm:$0xff]
  %v61 = vld [vmem:[%s1 + $0x8] sm:$0xff]
  %vm62 = vcmask 64512
  %v64 = vsel %vm62, %v51, 0
  %66 = vmatpush.msra.mxu0 0.0
  %67 = vmatpush.msra.mxu0 0.0
  %68 = vmatpush.msra.mxu0 0.0
  %69 = vmatpush.msra.mxu0 0.0
  %70 = vmatpush.msra.mxu0 0.0
  %71 = vmatpush.msra.mxu0 0.0
  %72 = vmatpush.msra.mxu0 0.0
  %73 = vmatpush.msra.mxu0 0.0
  %74 = vmatpush.msra.mxu0 0.0
  %75 = vmatpush.msra.mxu0 0.0
  %76 = vmatpush.msra.mxu0 0.0
  %77 = vmatpush.msra.mxu0 0.0
  %78 = vmatpush.msra.mxu0 0.0
  %79 = vmatpush.msra.mxu0 0.0
  %80 = vmatpush.msra.mxu0 0.0
  %81 = vmatpush.msra.mxu0 %v60
  %82 = vmatmul.f32.gmra.mxu0 %v64
  %v83 = vpop.f32.mrf.mxu0
  %v84 = vadd.f32 0.0, %v83
  %85 = vdwg.mxu0
  %86 = vmatpush.msra.mxu0 0.0
  %87 = vmatpush.msra.mxu0 0.0
  %88 = vmatpush.msra.mxu0 0.0
  %89 = vmatpush.msra.mxu0 0.0
  %90 = vmatpush.msra.mxu0 0.0
  %91 = vmatpush.msra.mxu0 0.0
  %92 = vmatpush.msra.mxu0 0.0
  %93 = vmatpush.msra.mxu0 0.0
  %94 = vmatpush.msra.mxu0 0.0
  %95 = vmatpush.msra.mxu0 0.0
  %96 = vmatpush.msra.mxu0 0.0
  %97 = vmatpush.msra.mxu0 0.0
  %98 = vmatpush.msra.mxu0 0.0
  %99 = vmatpush.msra.mxu0 0.0
  %100 = vmatpush.msra.mxu0 0.0
  %101 = vmatpush.msra.mxu0 %v61
  %102 = vmatmul.f32.gmra.mxu0 %v64
  %v103 = vpop.f32.mrf.mxu0
  %v104 = vadd.f32 0.0, %v103
  %105 = vdwg.mxu0
  %v107 = vsel %vm62, %v50, 0
  %109 = vmatpush.msra.mxu0 0.0
  %110 = vmatpush.msra.mxu0 0.0
  %111 = vmatpush.msra.mxu0 0.0
  %112 = vmatpush.msra.mxu0 0.0
  %113 = vmatpush.msra.mxu0 0.0
  %114 = vmatpush.msra.mxu0 0.0
  %115 = vmatpush.msra.mxu0 0.0
  %116 = vmatpush.msra.mxu0 0.0
  %117 = vmatpush.msra.mxu0 0.0
  %118 = vmatpush.msra.mxu0 0.0
  %119 = vmatpush.msra.mxu0 0.0
  %120 = vmatpush.msra.mxu0 0.0
  %121 = vmatpush.msra.mxu0 0.0
  %122 = vmatpush.msra.mxu0 0.0
  %123 = vmatpush.msra.mxu0 0.0
  %124 = vmatpush.msra.mxu0 %v58
  %125 = vmatmul.f32.gmra.mxu0 %v107
  %v126 = vpop.f32.mrf.mxu0
  %v127 = vadd.f32 %v84, %v126
  %128 = vdwg.mxu0
  %129 = vmatpush.msra.mxu0 0.0
  %130 = vmatpush.msra.mxu0 0.0
  %131 = vmatpush.msra.mxu0 0.0
  %132 = vmatpush.msra.mxu0 0.0
  %133 = vmatpush.msra.mxu0 0.0
  %134 = vmatpush.msra.mxu0 0.0
  %135 = vmatpush.msra.mxu0 0.0
  %136 = vmatpush.msra.mxu0 0.0
  %137 = vmatpush.msra.mxu0 0.0
  %138 = vmatpush.msra.mxu0 0.0
  %139 = vmatpush.msra.mxu0 0.0
  %140 = vmatpush.msra.mxu0 0.0
  %141 = vmatpush.msra.mxu0 0.0
  %142 = vmatpush.msra.mxu0 0.0
  %143 = vmatpush.msra.mxu0 0.0
  %144 = vmatpush.msra.mxu0 %v59
  %145 = vmatmul.f32.gmra.mxu0 %v107
  %v146 = vpop.f32.mrf.mxu0
  %v147 = vadd.f32 %v104, %v146
  %148 = vdwg.mxu0
  %v149 = vld [vmem:[%s2] sm:$0xff]
  %v150 = vld [vmem:[%s2 + $0x8] sm:$0xff]
  %v152 = vsel %vm62, %v52, 0
  %154 = vmatpush.msra.mxu0 0.0
  %155 = vmatpush.msra.mxu0 0.0
  %156 = vmatpush.msra.mxu0 0.0
  %157 = vmatpush.msra.mxu0 0.0
  %158 = vmatpush.msra.mxu0 0.0
  %159 = vmatpush.msra.mxu0 0.0
  %160 = vmatpush.msra.mxu0 0.0
  %161 = vmatpush.msra.mxu0 0.0
  %162 = vmatpush.msra.mxu0 0.0
  %163 = vmatpush.msra.mxu0 0.0
  %164 = vmatpush.msra.mxu0 0.0
  %165 = vmatpush.msra.mxu0 0.0
  %166 = vmatpush.msra.mxu0 0.0
  %167 = vmatpush.msra.mxu0 0.0
  %168 = vmatpush.msra.mxu0 0.0
  %169 = vmatpush.msra.mxu0 %v149
  %170 = vmatmul.f32.gmra.mxu0 %v152
  %v171 = vpop.f32.mrf.mxu0
  %v172 = vadd.f32 0.0, %v171
  %173 = vdwg.mxu0
  %174 = vmatpush.msra.mxu0 0.0
  %175 = vmatpush.msra.mxu0 0.0
  %176 = vmatpush.msra.mxu0 0.0
  %177 = vmatpush.msra.mxu0 0.0
  %178 = vmatpush.msra.mxu0 0.0
  %179 = vmatpush.msra.mxu0 0.0
  %180 = vmatpush.msra.mxu0 0.0
  %181 = vmatpush.msra.mxu0 0.0
  %182 = vmatpush.msra.mxu0 0.0
  %183 = vmatpush.msra.mxu0 0.0
  %184 = vmatpush.msra.mxu0 0.0
  %185 = vmatpush.msra.mxu0 0.0
  %186 = vmatpush.msra.mxu0 0.0
  %187 = vmatpush.msra.mxu0 0.0
  %188 = vmatpush.msra.mxu0 0.0
  %189 = vmatpush.msra.mxu0 %v150
  %190 = vmatmul.f32.gmra.mxu0 %v152
  %v191 = vpop.f32.mrf.mxu0
  %v192 = vadd.f32 0.0, %v191
  %193 = vdwg.mxu0
  %v194 = vadd.f32 %v127, %v172
  %v195 = vadd.f32 %v147, %v192
  %v196 = vld [vmem:[%s3] sm:$0xff]
  %v197 = vld [vmem:[%s3 + $0x8] sm:$0xff]
  %v198 = vld [vmem:[%s3 + $0x10] sm:$0xff]
  %v199 = vld [vmem:[%s3 + $0x18] sm:$0xff]
  %vm200 = vcmask 130048
  %v202 = vsel %vm200, %v53, 0
  %204 = vmatpush.msra.mxu0 0.0
  %205 = vmatpush.msra.mxu0 0.0
  %206 = vmatpush.msra.mxu0 0.0
  %207 = vmatpush.msra.mxu0 0.0
  %208 = vmatpush.msra.mxu0 0.0
  %209 = vmatpush.msra.mxu0 0.0
  %210 = vmatpush.msra.mxu0 0.0
  %211 = vmatpush.msra.mxu0 0.0
  %212 = vmatpush.msra.mxu0 0.0
  %213 = vmatpush.msra.mxu0 0.0
  %214 = vmatpush.msra.mxu0 0.0
  %215 = vmatpush.msra.mxu0 0.0
  %216 = vmatpush.msra.mxu0 0.0
  %217 = vmatpush.msra.mxu0 0.0
  %218 = vmatpush.msra.mxu0 %v198
  %219 = vmatpush.msra.mxu0 %v196
  %220 = vmatmul.f32.gmra.mxu0 %v202
  %v221 = vpop.f32.mrf.mxu0
  %v222 = vadd.f32 0.0, %v221
  %223 = vdwg.mxu0
  %224 = vmatpush.msra.mxu0 0.0
  %225 = vmatpush.msra.mxu0 0.0
  %226 = vmatpush.msra.mxu0 0.0
  %227 = vmatpush.msra.mxu0 0.0
  %228 = vmatpush.msra.mxu0 0.0
  %229 = vmatpush.msra.mxu0 0.0
  %230 = vmatpush.msra.mxu0 0.0
  %231 = vmatpush.msra.mxu0 0.0
  %232 = vmatpush.msra.mxu0 0.0
  %233 = vmatpush.msra.mxu0 0.0
  %234 = vmatpush.msra.mxu0 0.0
  %235 = vmatpush.msra.mxu0 0.0
  %236 = vmatpush.msra.mxu0 0.0
  %237 = vmatpush.msra.mxu0 0.0
  %238 = vmatpush.msra.mxu0 %v199
  %239 = vmatpush.msra.mxu0 %v197
  %240 = vmatmul.f32.gmra.mxu0 %v202
  %v241 = vpop.f32.mrf.mxu0
  %v242 = vadd.f32 0.0, %v241
  %243 = vdwg.mxu0
  %v244 = vadd.f32 %v194, %v222
  %v245 = vadd.f32 %v195, %v242
  %v246 = vld [vmem:[%s4] sm:$0xff]
  %v247 = vld [vmem:[%s4 + $0x8] sm:$0xff]
  %v248 = vld [vmem:[%s4 + $0x10] sm:$0xff]
  %v249 = vld [vmem:[%s4 + $0x18] sm:$0xff]
  %v251 = vsel %vm200, %v54, 0
  %253 = vmatpush.msra.mxu0 0.0
  %254 = vmatpush.msra.mxu0 0.0
  %255 = vmatpush.msra.mxu0 0.0
  %256 = vmatpush.msra.mxu0 0.0
  %257 = vmatpush.msra.mxu0 0.0
  %258 = vmatpush.msra.mxu0 0.0
  %259 = vmatpush.msra.mxu0 0.0
  %260 = vmatpush.msra.mxu0 0.0
  %261 = vmatpush.msra.mxu0 0.0
  %262 = vmatpush.msra.mxu0 0.0
  %263 = vmatpush.msra.mxu0 0.0
  %264 = vmatpush.msra.mxu0 0.0
  %265 = vmatpush.msra.mxu0 0.0
  %266 = vmatpush.msra.mxu0 0.0
  %267 = vmatpush.msra.mxu0 %v248
  %268 = vmatpush.msra.mxu0 %v246
  %269 = vmatmul.f32.gmra.mxu0 %v251
  %v270 = vpop.f32.mrf.mxu0
  %v271 = vadd.f32 0.0, %v270
  %272 = vdwg.mxu0
  %273 = vmatpush.msra.mxu0 0.0
  %274 = vmatpush.msra.mxu0 0.0
  %275 = vmatpush.msra.mxu0 0.0
  %276 = vmatpush.msra.mxu0 0.0
  %277 = vmatpush.msra.mxu0 0.0
  %278 = vmatpush.msra.mxu0 0.0
  %279 = vmatpush.msra.mxu0 0.0
  %280 = vmatpush.msra.mxu0 0.0
  %281 = vmatpush.msra.mxu0 0.0
  %282 = vmatpush.msra.mxu0 0.0
  %283 = vmatpush.msra.mxu0 0.0
  %284 = vmatpush.msra.mxu0 0.0
  %285 = vmatpush.msra.mxu0 0.0
  %286 = vmatpush.msra.mxu0 0.0
  %287 = vmatpush.msra.mxu0 %v249
  %288 = vmatpush.msra.mxu0 %v247
  %289 = vmatmul.f32.gmra.mxu0 %v251
  %v290 = vpop.f32.mrf.mxu0
  %v291 = vadd.f32 0.0, %v290
  %292 = vdwg.mxu0
  %v293 = vadd.f32 %v244, %v271
  %v294 = vadd.f32 %v245, %v291
  %v295 = vld [vmem:[%s5] sm:$0xff]
  %v296 = vld [vmem:[%s5 + $0x8] sm:$0xff]
  %v297 = vld [vmem:[%s5 + $0x10] sm:$0xff]
  %v298 = vld [vmem:[%s5 + $0x18] sm:$0xff]
  %v300 = vsel %vm200, %v55, 0
  %302 = vmatpush.msra.mxu0 0.0
  %303 = vmatpush.msra.mxu0 0.0
  %304 = vmatpush.msra.mxu0 0.0
  %305 = vmatpush.msra.mxu0 0.0
  %306 = vmatpush.msra.mxu0 0.0
  %307 = vmatpush.msra.mxu0 0.0
  %308 = vmatpush.msra.mxu0 0.0
  %309 = vmatpush.msra.mxu0 0.0
  %310 = vmatpush.msra.mxu0 0.0
  %311 = vmatpush.msra.mxu0 0.0
  %312 = vmatpush.msra.mxu0 0.0
  %313 = vmatpush.msra.mxu0 0.0
  %314 = vmatpush.msra.mxu0 0.0
  %315 = vmatpush.msra.mxu0 0.0
  %316 = vmatpush.msra.mxu0 %v297
  %317 = vmatpush.msra.mxu0 %v295
  %318 = vmatmul.f32.gmra.mxu0 %v300
  %v319 = vpop.f32.mrf.mxu0
  %v320 = vadd.f32 0.0, %v319
  %321 = vdwg.mxu0
  %322 = vmatpush.msra.mxu0 0.0
  %323 = vmatpush.msra.mxu0 0.0
  %324 = vmatpush.msra.mxu0 0.0
  %325 = vmatpush.msra.mxu0 0.0
  %326 = vmatpush.msra.mxu0 0.0
  %327 = vmatpush.msra.mxu0 0.0
  %328 = vmatpush.msra.mxu0 0.0
  %329 = vmatpush.msra.mxu0 0.0
  %330 = vmatpush.msra.mxu0 0.0
  %331 = vmatpush.msra.mxu0 0.0
  %332 = vmatpush.msra.mxu0 0.0
  %333 = vmatpush.msra.mxu0 0.0
  %334 = vmatpush.msra.mxu0 0.0
  %335 = vmatpush.msra.mxu0 0.0
  %336 = vmatpush.msra.mxu0 %v298
  %337 = vmatpush.msra.mxu0 %v296
  %338 = vmatmul.f32.gmra.mxu0 %v300
  %v339 = vpop.f32.mrf.mxu0
  %v340 = vadd.f32 0.0, %v339
  %341 = vdwg.mxu0
  %v342 = vadd.f32 %v293, %v320
  %v343 = vadd.f32 %v294, %v340
  %v344 = vld [vmem:[%s6] sm:$0xff]
  %v345 = vld [vmem:[%s6 + $0x8] sm:$0xff]
  %v346 = vld [vmem:[%s6 + $0x10] sm:$0xff]
  %v347 = vld [vmem:[%s6 + $0x18] sm:$0xff]
  %v349 = vsel %vm200, %v56, 0
  %351 = vmatpush.msra.mxu0 0.0
  %352 = vmatpush.msra.mxu0 0.0
  %353 = vmatpush.msra.mxu0 0.0
  %354 = vmatpush.msra.mxu0 0.0
  %355 = vmatpush.msra.mxu0 0.0
  %356 = vmatpush.msra.mxu0 0.0
  %357 = vmatpush.msra.mxu0 0.0
  %358 = vmatpush.msra.mxu0 0.0
  %359 = vmatpush.msra.mxu0 0.0
  %360 = vmatpush.msra.mxu0 0.0
  %361 = vmatpush.msra.mxu0 0.0
  %362 = vmatpush.msra.mxu0 0.0
  %363 = vmatpush.msra.mxu0 0.0
  %364 = vmatpush.msra.mxu0 0.0
  %365 = vmatpush.msra.mxu0 %v346
  %366 = vmatpush.msra.mxu0 %v344
  %367 = vmatmul.f32.gmra.mxu0 %v349
  %v368 = vpop.f32.mrf.mxu0
  %v369 = vadd.f32 0.0, %v368
  %370 = vdwg.mxu0
  %371 = vmatpush.msra.mxu0 0.0
  %372 = vmatpush.msra.mxu0 0.0
  %373 = vmatpush.msra.mxu0 0.0
  %374 = vmatpush.msra.mxu0 0.0
  %375 = vmatpush.msra.mxu0 0.0
  %376 = vmatpush.msra.mxu0 0.0
  %377 = vmatpush.msra.mxu0 0.0
  %378 = vmatpush.msra.mxu0 0.0
  %379 = vmatpush.msra.mxu0 0.0
  %380 = vmatpush.msra.mxu0 0.0
  %381 = vmatpush.msra.mxu0 0.0
  %382 = vmatpush.msra.mxu0 0.0
  %383 = vmatpush.msra.mxu0 0.0
  %384 = vmatpush.msra.mxu0 0.0
  %385 = vmatpush.msra.mxu0 %v347
  %386 = vmatpush.msra.mxu0 %v345
  %387 = vmatmul.f32.gmra.mxu0 %v349
  %v388 = vpop.f32.mrf.mxu0
  %v389 = vadd.f32 0.0, %v388
  %390 = vdwg.mxu0
  %v391 = vadd.f32 %v342, %v369
  %v392 = vadd.f32 %v343, %v389
  %394 = vset.pattern.permute.xlu0 0
  %395 = vperm.xlu0 %394, %v57
  %v396 = vpop.permute.xlu0 %395
  %v398 = vadd.f32 %v391, %v396
  %v399 = vadd.f32 %v392, %v396
  %400 = vst [vmem:[%s15] sm:$0xff] %v398
  %401 = vst [vmem:[%s15 + $0x8] sm:$0xff] %v399
  %s402 = scalar_lea.vmem %s0, 16
  %v403 = vld [vmem:[%s402] sm:$0xff]
  %v404 = vld [vmem:[%s402 + $0x8] sm:$0xff]
  %s405 = scalar_lea.vmem %s1, 16
  %v406 = vld [vmem:[%s405] sm:$0xff]
  %v407 = vld [vmem:[%s405 + $0x8] sm:$0xff]
  %408 = vmatpush.msra.mxu0 0.0
  %409 = vmatpush.msra.mxu0 0.0
  %410 = vmatpush.msra.mxu0 0.0
  %411 = vmatpush.msra.mxu0 0.0
  %412 = vmatpush.msra.mxu0 0.0
  %413 = vmatpush.msra.mxu0 0.0
  %414 = vmatpush.msra.mxu0 0.0
  %415 = vmatpush.msra.mxu0 0.0
  %416 = vmatpush.msra.mxu0 0.0
  %417 = vmatpush.msra.mxu0 0.0
  %418 = vmatpush.msra.mxu0 0.0
  %419 = vmatpush.msra.mxu0 0.0
  %420 = vmatpush.msra.mxu0 0.0
  %421 = vmatpush.msra.mxu0 0.0
  %422 = vmatpush.msra.mxu0 0.0
  %423 = vmatpush.msra.mxu0 %v406
  %424 = vmatmul.f32.gmra.mxu0 %v64
  %v425 = vpop.f32.mrf.mxu0
  %v426 = vadd.f32 0.0, %v425
  %427 = vdwg.mxu0
  %428 = vmatpush.msra.mxu0 0.0
  %429 = vmatpush.msra.mxu0 0.0
  %430 = vmatpush.msra.mxu0 0.0
  %431 = vmatpush.msra.mxu0 0.0
  %432 = vmatpush.msra.mxu0 0.0
  %433 = vmatpush.msra.mxu0 0.0
  %434 = vmatpush.msra.mxu0 0.0
  %435 = vmatpush.msra.mxu0 0.0
  %436 = vmatpush.msra.mxu0 0.0
  %437 = vmatpush.msra.mxu0 0.0
  %438 = vmatpush.msra.mxu0 0.0
  %439 = vmatpush.msra.mxu0 0.0
  %440 = vmatpush.msra.mxu0 0.0
  %441 = vmatpush.msra.mxu0 0.0
  %442 = vmatpush.msra.mxu0 0.0
  %443 = vmatpush.msra.mxu0 %v407
  %444 = vmatmul.f32.gmra.mxu0 %v64
  %v445 = vpop.f32.mrf.mxu0
  %v446 = vadd.f32 0.0, %v445
  %447 = vdwg.mxu0
  %448 = vmatpush.msra.mxu0 0.0
  %449 = vmatpush.msra.mxu0 0.0
  %450 = vmatpush.msra.mxu0 0.0
  %451 = vmatpush.msra.mxu0 0.0
  %452 = vmatpush.msra.mxu0 0.0
  %453 = vmatpush.msra.mxu0 0.0
  %454 = vmatpush.msra.mxu0 0.0
  %455 = vmatpush.msra.mxu0 0.0
  %456 = vmatpush.msra.mxu0 0.0
  %457 = vmatpush.msra.mxu0 0.0
  %458 = vmatpush.msra.mxu0 0.0
  %459 = vmatpush.msra.mxu0 0.0
  %460 = vmatpush.msra.mxu0 0.0
  %461 = vmatpush.msra.mxu0 0.0
  %462 = vmatpush.msra.mxu0 0.0
  %463 = vmatpush.msra.mxu0 %v403
  %464 = vmatmul.f32.gmra.mxu0 %v107
  %v465 = vpop.f32.mrf.mxu0
  %v466 = vadd.f32 %v426, %v465
  %467 = vdwg.mxu0
  %468 = vmatpush.msra.mxu0 0.0
  %469 = vmatpush.msra.mxu0 0.0
  %470 = vmatpush.msra.mxu0 0.0
  %471 = vmatpush.msra.mxu0 0.0
  %472 = vmatpush.msra.mxu0 0.0
  %473 = vmatpush.msra.mxu0 0.0
  %474 = vmatpush.msra.mxu0 0.0
  %475 = vmatpush.msra.mxu0 0.0
  %476 = vmatpush.msra.mxu0 0.0
  %477 = vmatpush.msra.mxu0 0.0
  %478 = vmatpush.msra.mxu0 0.0
  %479 = vmatpush.msra.mxu0 0.0
  %480 = vmatpush.msra.mxu0 0.0
  %481 = vmatpush.msra.mxu0 0.0
  %482 = vmatpush.msra.mxu0 0.0
  %483 = vmatpush.msra.mxu0 %v404
  %484 = vmatmul.f32.gmra.mxu0 %v107
  %v485 = vpop.f32.mrf.mxu0
  %v486 = vadd.f32 %v446, %v485
  %487 = vdwg.mxu0
  %s488 = scalar_lea.vmem %s2, 16
  %v489 = vld [vmem:[%s488] sm:$0xff]
  %v490 = vld [vmem:[%s488 + $0x8] sm:$0xff]
  %491 = vmatpush.msra.mxu0 0.0
  %492 = vmatpush.msra.mxu0 0.0
  %493 = vmatpush.msra.mxu0 0.0
  %494 = vmatpush.msra.mxu0 0.0
  %495 = vmatpush.msra.mxu0 0.0
  %496 = vmatpush.msra.mxu0 0.0
  %497 = vmatpush.msra.mxu0 0.0
  %498 = vmatpush.msra.mxu0 0.0
  %499 = vmatpush.msra.mxu0 0.0
  %500 = vmatpush.msra.mxu0 0.0
  %501 = vmatpush.msra.mxu0 0.0
  %502 = vmatpush.msra.mxu0 0.0
  %503 = vmatpush.msra.mxu0 0.0
  %504 = vmatpush.msra.mxu0 0.0
  %505 = vmatpush.msra.mxu0 0.0
  %506 = vmatpush.msra.mxu0 %v489
  %507 = vmatmul.f32.gmra.mxu0 %v152
  %v508 = vpop.f32.mrf.mxu0
  %v509 = vadd.f32 0.0, %v508
  %510 = vdwg.mxu0
  %511 = vmatpush.msra.mxu0 0.0
  %512 = vmatpush.msra.mxu0 0.0
  %513 = vmatpush.msra.mxu0 0.0
  %514 = vmatpush.msra.mxu0 0.0
  %515 = vmatpush.msra.mxu0 0.0
  %516 = vmatpush.msra.mxu0 0.0
  %517 = vmatpush.msra.mxu0 0.0
  %518 = vmatpush.msra.mxu0 0.0
  %519 = vmatpush.msra.mxu0 0.0
  %520 = vmatpush.msra.mxu0 0.0
  %521 = vmatpush.msra.mxu0 0.0
  %522 = vmatpush.msra.mxu0 0.0
  %523 = vmatpush.msra.mxu0 0.0
  %524 = vmatpush.msra.mxu0 0.0
  %525 = vmatpush.msra.mxu0 0.0
  %526 = vmatpush.msra.mxu0 %v490
  %527 = vmatmul.f32.gmra.mxu0 %v152
  %v528 = vpop.f32.mrf.mxu0
  %v529 = vadd.f32 0.0, %v528
  %530 = vdwg.mxu0
  %v531 = vadd.f32 %v466, %v509
  %v532 = vadd.f32 %v486, %v529
  %s533 = scalar_lea.vmem %s3, 32
  %v534 = vld [vmem:[%s533] sm:$0xff]
  %v535 = vld [vmem:[%s533 + $0x8] sm:$0xff]
  %v536 = vld [vmem:[%s533 + $0x10] sm:$0xff]
  %v537 = vld [vmem:[%s533 + $0x18] sm:$0xff]
  %538 = vmatpush.msra.mxu0 0.0
  %539 = vmatpush.msra.mxu0 0.0
  %540 = vmatpush.msra.mxu0 0.0
  %541 = vmatpush.msra.mxu0 0.0
  %542 = vmatpush.msra.mxu0 0.0
  %543 = vmatpush.msra.mxu0 0.0
  %544 = vmatpush.msra.mxu0 0.0
  %545 = vmatpush.msra.mxu0 0.0
  %546 = vmatpush.msra.mxu0 0.0
  %547 = vmatpush.msra.mxu0 0.0
  %548 = vmatpush.msra.mxu0 0.0
  %549 = vmatpush.msra.mxu0 0.0
  %550 = vmatpush.msra.mxu0 0.0
  %551 = vmatpush.msra.mxu0 0.0
  %552 = vmatpush.msra.mxu0 %v536
  %553 = vmatpush.msra.mxu0 %v534
  %554 = vmatmul.f32.gmra.mxu0 %v202
  %v555 = vpop.f32.mrf.mxu0
  %v556 = vadd.f32 0.0, %v555
  %557 = vdwg.mxu0
  %558 = vmatpush.msra.mxu0 0.0
  %559 = vmatpush.msra.mxu0 0.0
  %560 = vmatpush.msra.mxu0 0.0
  %561 = vmatpush.msra.mxu0 0.0
  %562 = vmatpush.msra.mxu0 0.0
  %563 = vmatpush.msra.mxu0 0.0
  %564 = vmatpush.msra.mxu0 0.0
  %565 = vmatpush.msra.mxu0 0.0
  %566 = vmatpush.msra.mxu0 0.0
  %567 = vmatpush.msra.mxu0 0.0
  %568 = vmatpush.msra.mxu0 0.0
  %569 = vmatpush.msra.mxu0 0.0
  %570 = vmatpush.msra.mxu0 0.0
  %571 = vmatpush.msra.mxu0 0.0
  %572 = vmatpush.msra.mxu0 %v537
  %573 = vmatpush.msra.mxu0 %v535
  %574 = vmatmul.f32.gmra.mxu0 %v202
  %v575 = vpop.f32.mrf.mxu0
  %v576 = vadd.f32 0.0, %v575
  %577 = vdwg.mxu0
  %v578 = vadd.f32 %v531, %v556
  %v579 = vadd.f32 %v532, %v576
  %s580 = scalar_lea.vmem %s4, 32
  %v581 = vld [vmem:[%s580] sm:$0xff]
  %v582 = vld [vmem:[%s580 + $0x8] sm:$0xff]
  %v583 = vld [vmem:[%s580 + $0x10] sm:$0xff]
  %v584 = vld [vmem:[%s580 + $0x18] sm:$0xff]
  %585 = vmatpush.msra.mxu0 0.0
  %586 = vmatpush.msra.mxu0 0.0
  %587 = vmatpush.msra.mxu0 0.0
  %588 = vmatpush.msra.mxu0 0.0
  %589 = vmatpush.msra.mxu0 0.0
  %590 = vmatpush.msra.mxu0 0.0
  %591 = vmatpush.msra.mxu0 0.0
  %592 = vmatpush.msra.mxu0 0.0
  %593 = vmatpush.msra.mxu0 0.0
  %594 = vmatpush.msra.mxu0 0.0
  %595 = vmatpush.msra.mxu0 0.0
  %596 = vmatpush.msra.mxu0 0.0
  %597 = vmatpush.msra.mxu0 0.0
  %598 = vmatpush.msra.mxu0 0.0
  %599 = vmatpush.msra.mxu0 %v583
  %600 = vmatpush.msra.mxu0 %v581
  %601 = vmatmul.f32.gmra.mxu0 %v251
  %v602 = vpop.f32.mrf.mxu0
  %v603 = vadd.f32 0.0, %v602
  %604 = vdwg.mxu0
  %605 = vmatpush.msra.mxu0 0.0
  %606 = vmatpush.msra.mxu0 0.0
  %607 = vmatpush.msra.mxu0 0.0
  %608 = vmatpush.msra.mxu0 0.0
  %609 = vmatpush.msra.mxu0 0.0
  %610 = vmatpush.msra.mxu0 0.0
  %611 = vmatpush.msra.mxu0 0.0
  %612 = vmatpush.msra.mxu0 0.0
  %613 = vmatpush.msra.mxu0 0.0
  %614 = vmatpush.msra.mxu0 0.0
  %615 = vmatpush.msra.mxu0 0.0
  %616 = vmatpush.msra.mxu0 0.0
  %617 = vmatpush.msra.mxu0 0.0
  %618 = vmatpush.msra.mxu0 0.0
  %619 = vmatpush.msra.mxu0 %v584
  %620 = vmatpush.msra.mxu0 %v582
  %621 = vmatmul.f32.gmra.mxu0 %v251
  %v622 = vpop.f32.mrf.mxu0
  %v623 = vadd.f32 0.0, %v622
  %624 = vdwg.mxu0
  %v625 = vadd.f32 %v578, %v603
  %v626 = vadd.f32 %v579, %v623
  %s627 = scalar_lea.vmem %s5, 32
  %v628 = vld [vmem:[%s627] sm:$0xff]
  %v629 = vld [vmem:[%s627 + $0x8] sm:$0xff]
  %v630 = vld [vmem:[%s627 + $0x10] sm:$0xff]
  %v631 = vld [vmem:[%s627 + $0x18] sm:$0xff]
  %632 = vmatpush.msra.mxu0 0.0
  %633 = vmatpush.msra.mxu0 0.0
  %634 = vmatpush.msra.mxu0 0.0
  %635 = vmatpush.msra.mxu0 0.0
  %636 = vmatpush.msra.mxu0 0.0
  %637 = vmatpush.msra.mxu0 0.0
  %638 = vmatpush.msra.mxu0 0.0
  %639 = vmatpush.msra.mxu0 0.0
  %640 = vmatpush.msra.mxu0 0.0
  %641 = vmatpush.msra.mxu0 0.0
  %642 = vmatpush.msra.mxu0 0.0
  %643 = vmatpush.msra.mxu0 0.0
  %644 = vmatpush.msra.mxu0 0.0
  %645 = vmatpush.msra.mxu0 0.0
  %646 = vmatpush.msra.mxu0 %v630
  %647 = vmatpush.msra.mxu0 %v628
  %648 = vmatmul.f32.gmra.mxu0 %v300
  %v649 = vpop.f32.mrf.mxu0
  %v650 = vadd.f32 0.0, %v649
  %651 = vdwg.mxu0
  %652 = vmatpush.msra.mxu0 0.0
  %653 = vmatpush.msra.mxu0 0.0
  %654 = vmatpush.msra.mxu0 0.0
  %655 = vmatpush.msra.mxu0 0.0
  %656 = vmatpush.msra.mxu0 0.0
  %657 = vmatpush.msra.mxu0 0.0
  %658 = vmatpush.msra.mxu0 0.0
  %659 = vmatpush.msra.mxu0 0.0
  %660 = vmatpush.msra.mxu0 0.0
  %661 = vmatpush.msra.mxu0 0.0
  %662 = vmatpush.msra.mxu0 0.0
  %663 = vmatpush.msra.mxu0 0.0
  %664 = vmatpush.msra.mxu0 0.0
  %665 = vmatpush.msra.mxu0 0.0
  %666 = vmatpush.msra.mxu0 %v631
  %667 = vmatpush.msra.mxu0 %v629
  %668 = vmatmul.f32.gmra.mxu0 %v300
  %v669 = vpop.f32.mrf.mxu0
  %v670 = vadd.f32 0.0, %v669
  %671 = vdwg.mxu0
  %v672 = vadd.f32 %v625, %v650
  %v673 = vadd.f32 %v626, %v670
  %s674 = scalar_lea.vmem %s6, 32
  %v675 = vld [vmem:[%s674] sm:$0xff]
  %v676 = vld [vmem:[%s674 + $0x8] sm:$0xff]
  %v677 = vld [vmem:[%s674 + $0x10] sm:$0xff]
  %v678 = vld [vmem:[%s674 + $0x18] sm:$0xff]
  %679 = vmatpush.msra.mxu0 0.0
  %680 = vmatpush.msra.mxu0 0.0
  %681 = vmatpush.msra.mxu0 0.0
  %682 = vmatpush.msra.mxu0 0.0
  %683 = vmatpush.msra.mxu0 0.0
  %684 = vmatpush.msra.mxu0 0.0
  %685 = vmatpush.msra.mxu0 0.0
  %686 = vmatpush.msra.mxu0 0.0
  %687 = vmatpush.msra.mxu0 0.0
  %688 = vmatpush.msra.mxu0 0.0
  %689 = vmatpush.msra.mxu0 0.0
  %690 = vmatpush.msra.mxu0 0.0
  %691 = vmatpush.msra.mxu0 0.0
  %692 = vmatpush.msra.mxu0 0.0
  %693 = vmatpush.msra.mxu0 %v677
  %694 = vmatpush.msra.mxu0 %v675
  %695 = vmatmul.f32.gmra.mxu0 %v349
  %v696 = vpop.f32.mrf.mxu0
  %v697 = vadd.f32 0.0, %v696
  %698 = vdwg.mxu0
  %699 = vmatpush.msra.mxu0 0.0
  %700 = vmatpush.msra.mxu0 0.0
  %701 = vmatpush.msra.mxu0 0.0
  %702 = vmatpush.msra.mxu0 0.0
  %703 = vmatpush.msra.mxu0 0.0
  %704 = vmatpush.msra.mxu0 0.0
  %705 = vmatpush.msra.mxu0 0.0
  %706 = vmatpush.msra.mxu0 0.0
  %707 = vmatpush.msra.mxu0 0.0
  %708 = vmatpush.msra.mxu0 0.0
  %709 = vmatpush.msra.mxu0 0.0
  %710 = vmatpush.msra.mxu0 0.0
  %711 = vmatpush.msra.mxu0 0.0
  %712 = vmatpush.msra.mxu0 0.0
  %713 = vmatpush.msra.mxu0 %v678
  %714 = vmatpush.msra.mxu0 %v676
  %715 = vmatmul.f32.gmra.mxu0 %v349
  %v716 = vpop.f32.mrf.mxu0
  %v717 = vadd.f32 0.0, %v716
  %718 = vdwg.mxu0
  %v719 = vadd.f32 %v672, %v697
  %v720 = vadd.f32 %v673, %v717
  %v721 = vadd.f32 %v719, %v396
  %v722 = vadd.f32 %v720, %v396
  %s723 = scalar_lea.vmem %s15, 16
  %724 = vst [vmem:[%s723] sm:$0xff] %v721
  %725 = vst [vmem:[%s723 + $0x8] sm:$0xff] %v722
  // Predicated region
  $region62: #{forward.1} parent=0 // pred_check
    _
  $region63: #{forward.1} parent=0 // pred_check_branch
    %727 = sbr.rel (0) target = $region65
  $region64: #{forward.1} parent=0 // pred_region
    _
  $region65: #{forward.1} parent=0 // pred_fallthru
    _
  // Predicated region
  $region66: #{forward.1} parent=0 // pred_check
    _
  $region67: #{forward.1} parent=0 // pred_check_branch
    %729 = sbr.rel (0) target = $region69
  $region68: #{forward.1} parent=0 // pred_region
    _
  $region69: #{forward.1} parent=0 // pred_fallthru
    _

</llo_original>
